<compile_context>
chip_gen: v7x
topology: tpu7x:2x2x1
jax: 0.10.0
libtpu: 0.0.40
codegen_flags: <defaults>
</compile_context>

<pallas_src>
import functools
import math

import numpy as np
import jax
import jax.numpy as jnp
from jax.experimental import pallas as pl
from jax.experimental.pallas import tpu as pltpu

SQRT_2_OVER_PI = math.sqrt(2.0 / math.pi)


def _approx_std_normal_cdf(x):
    # 0.5 * (1 + tanh(sqrt(2/pi) * (x + 0.044715 x^3)))
    return 0.5 * (1.0 + jnp.tanh(SQRT_2_OVER_PI * (x + 0.044715 * x * x * x)))


def _step_loss_kernel(coefs_ref, z0_ref, noise_ref, waug_ref, out_ref,
                      *, T, num_bits):
    b = pl.program_id(0)

    # per-batch scalars (gathered by t on the host, held in SMEM)
    sqrt_ac = coefs_ref[b, 0]     # sqrt(alphas_cumprod[t_b])
    sqrt_1mac = coefs_ref[b, 1]   # sqrt(1 - alphas_cumprod[t_b])
    coef1 = coefs_ref[b, 2]       # posterior_mean_coef1[t_b]
    coef2 = coefs_ref[b, 3]       # posterior_mean_coef2[t_b]
    q_logvar = coefs_ref[b, 4]    # posterior_log_variance_clipped[t_b]
    q_var = coefs_ref[b, 5]       # exp(q_logvar), precomputed on host
    is_t0 = coefs_ref[b, 6]       # 1.0 where t_b == 0 else 0.0

    z0 = z0_ref[0]        # (C, S)
    noise = noise_ref[0]  # (C, S)
    C = z0.shape[0]

    # ---- q_sample ----
    z_t = sqrt_ac * z0 + sqrt_1mac * noise

    # ---- synthetic model: 1x1 conv (channel matmul) + per-timestep bias ----
    # w_aug = [W | time_emb[t_b]]  : (2C, C+1)
    w_aug = waug_ref[0]
    w = w_aug[:, :C]                  # (2C, C)
    bias = w_aug[:, C:]               # (2C, 1), broadcasts over S
    h = jnp.dot(w, z_t, preferred_element_type=jnp.float32) + bias
    p_mean = h[:C]                    # torch.chunk(.., 2, dim=1) first half
    p_logvar = h[C:]                  # second half (num_bits is not None -> no clamp)

    scale = float(T)                  # * T / len(t_to_loop), train mode => len == 1
    t_is_zero = is_t0 > 0.5

    # ---- reconstruction branch (only where t == 0): discretized gaussian ll ----
    @pl.when(t_is_zero)
    def _():
        bins = float(2 ** num_bits - 1)
        inv_stdv = jnp.exp(-0.5 * p_logvar)          # exp(-log_scales)
        centered = z0 - p_mean
        plus_in = inv_stdv * (centered + 1.0 / bins)
        cdf_plus = _approx_std_normal_cdf(plus_in)
        min_in = inv_stdv * (centered - 1.0 / bins)
        cdf_min = _approx_std_normal_cdf(min_in)
        log_cdf_plus = jnp.log(jnp.maximum(cdf_plus, 1e-10))
        log_one_minus_cdf_min = jnp.log(jnp.maximum(1.0 - cdf_min, 1e-10))
        log_cdf_delta = jnp.log(jnp.maximum(cdf_plus - cdf_min, 1e-10))
        log_probs = jnp.where(
            z0 <= -1.0 + 1.0 / bins, log_cdf_plus,
            jnp.where(z0 >= 1.0 - 1.0 / bins, log_one_minus_cdf_min,
                      log_cdf_delta))
        out_ref[...] = jnp.full((1, 1, 1), jnp.sum(log_probs) * scale,
                                dtype=jnp.float32)

    # ---- KL branch (only where t != 0): KL(q_posterior || p), diag Gaussians ----
    @pl.when(jnp.logical_not(t_is_zero))
    def _():
        q_mean = coef1 * z0 + coef2 * z_t
        diff = q_mean - p_mean
        kl = 0.5 * (p_logvar - q_logvar
                    + (q_var + diff * diff) * jnp.exp(-p_logvar)
                    - 1.0)
        out_ref[...] = jnp.full((1, 1, 1), -jnp.sum(kl) * scale,
                                dtype=jnp.float32)


class DiffusionPriorPallas:
    """JAX/Pallas port of DiffusionPrior with a synthetic 1x1-conv model."""

    def __init__(self, in_channels, image_size, T=10, beta_schedule="linear",
                 num_bits=5, key=None):
        self.C = in_channels
        self.image_size = image_size
        self.T = T
        self.num_bits = num_bits

        # --- beta schedule + derived quantities (numpy float64, as in torch) ---
        self.beta = self._get_beta_schedule(beta_schedule)
        self.alphas_cumprod = np.cumprod(1.0 - self.beta, axis=0)
        ac_prev = np.append(1.0, self.alphas_cumprod[:-1])
        self.posterior_variance = (self.beta * (1.0 - ac_prev)
                                   / (1.0 - self.alphas_cumprod))
        self.posterior_log_variance_clipped = np.log(
            np.append(self.posterior_variance[1], self.posterior_variance[1:]))
        self.posterior_mean_coef1 = (self.beta * np.sqrt(ac_prev)
                                     / (1.0 - self.alphas_cumprod))
        self.posterior_mean_coef2 = ((1.0 - ac_prev) * np.sqrt(1.0 - self.beta)
                                     / (1.0 - self.alphas_cumprod))

        # --- deterministic synthetic model parameters ---
        if key is None:
            key = jax.random.PRNGKey(0)
        kw, kt = jax.random.split(key)
        C = in_channels
        self.w = (jax.random.normal(kw, (2 * C, C), jnp.float32)
                  / math.sqrt(C))                       # 1x1 conv weight
        self.time_emb = 0.1 * jax.random.normal(kt, (T, 2 * C), jnp.float32)

    def _get_beta_schedule(self, name):
        s = 0.008
        if name == "cosine":
            betas, max_beta = [], 0.999
            fn = lambda t: math.cos((t + s) / (1 + s) * math.pi / 2) ** 2
            for i in range(self.T):
                t1, t2 = i / self.T, (i + 1) / self.T
                betas.append(min(1 - fn(t2) / fn(t1), max_beta))
            return np.array(betas)
        elif name == "linear":
            if self.T < 21:
                scale, multiply = 100 / self.T, 0.01
            else:
                scale, multiply = 1000 / self.T, 0.001
            return np.linspace(scale * multiply, scale * 0.02, self.T,
                               dtype=np.float64)
        else:
            raise NotImplementedError(f"unknown beta schedule: {name}")

    def log_prob(self, z0_nchw, t, noise_nchw):
        """z0_nchw, noise_nchw: (B, C, H, W) float32; t: (B,) int32 (concrete).

        Returns per-batch log-likelihood, matching PyTorch log_prob(mode='train',
        reduce_dim=True) with the sampled t and q_sample noise externalized.
        NOTE: t must be concrete (host numpy), mirroring the PyTorch host-side
        t sampling; this function is not intended to be traced with abstract t.
        """
        B, C, H, W = z0_nchw.shape
        S = H * W
        z0 = z0_nchw.reshape(B, C, S).astype(jnp.float32)
        noise = noise_nchw.reshape(B, C, S).astype(jnp.float32)
        # TODO(synk): for production-size images (large C/S), add an S grid axis
        # with lane-dense tiles and accumulate partial kl/rec sums in scratch
        # (required to fit v7x's 64 MiB VMEM); optionally DMA z0/noise as bf16
        # on v6e/v7x when memory-bound. Not needed at this toy shape.

        t_np = np.asarray(t)
        coefs = np.zeros((B, 8), dtype=np.float32)
        coefs[:, 0] = np.sqrt(self.alphas_cumprod)[t_np]
        coefs[:, 1] = np.sqrt(1.0 - self.alphas_cumprod)[t_np]
        coefs[:, 2] = self.posterior_mean_coef1[t_np]
        coefs[:, 3] = self.posterior_mean_coef2[t_np]
        coefs[:, 4] = self.posterior_log_variance_clipped[t_np]
        coefs[:, 5] = np.exp(self.posterior_log_variance_clipped[t_np])  # q_var
        coefs[:, 6] = (t_np == 0).astype(np.float32)
        coefs = jnp.asarray(coefs)

        # Per-batch augmented weight [W | time_emb[t_b]] : (B, 2C, C+1).
        temb_b = self.time_emb[jnp.asarray(t_np)]            # (B, 2C)
        w_aug = jnp.concatenate(
            [jnp.broadcast_to(self.w[None], (B, 2 * C, C)),
             temb_b[:, :, None]], axis=2)                    # (B, 2C, C+1)

        kernel = functools.partial(_step_loss_kernel, T=self.T,
                                   num_bits=self.num_bits)
        out = pl.pallas_call(
            kernel,
            out_shape=jax.ShapeDtypeStruct((B, 1, 1), jnp.float32),
            grid_spec=pltpu.PrefetchScalarGridSpec(
                num_scalar_prefetch=0,
                grid=(B,),
                in_specs=[
                    pl.BlockSpec(memory_space=pltpu.MemorySpace.SMEM),    # coefs
                    pl.BlockSpec((1, C, S), lambda b: (b, 0, 0)),         # z0
                    pl.BlockSpec((1, C, S), lambda b: (b, 0, 0)),         # noise
                    pl.BlockSpec((1, 2 * C, C + 1), lambda b: (b, 0, 0)),  # W_aug
                ],
                # Per-step scalar output block; for large B an SMEM-accumulated
                # single lane-dense store would shave the per-step epilogue.
                out_specs=pl.BlockSpec((1, 1, 1), lambda b: (b, 0, 0)),
            ),
            compiler_params=pltpu.CompilerParams(
                dimension_semantics=("parallel",)),   # batch steps independent
        )(coefs, z0, noise, w_aug)
        return out[:, 0, 0]

    # TODO(synk): sample()/p_sample() (ancestral sampling loop) and the
    # loss-aware t-history update are host-side control flow not ported here.


if __name__ == "__main__":
    key = jax.random.PRNGKey(0)
    k_data, k_noise, k_model = jax.random.split(key, 3)

    B, C, H, W = 2, 4, 16, 16
    T = 10

    # z_0 assumed to be uint8-like data rescaled to [-1, 1]
    z0 = jax.random.uniform(k_data, (B, C, H, W), jnp.float32,
                            minval=-1.0, maxval=1.0)
    noise = jax.random.normal(k_noise, (B, C, H, W), jnp.float32)
    # deterministic timesteps; t=0 exercises the reconstruction branch,
    # t=3 exercises the KL branch.
    t = jnp.array([0, 3], dtype=jnp.int32)

    prior = DiffusionPriorPallas(in_channels=C, image_size=H, T=T,
                                 beta_schedule="linear", num_bits=5,
                                 key=k_model)
    ll = prior.log_prob(z0, t, noise)
    jax.block_until_ready(ll)
    assert ll.shape == (B,) and bool(jnp.all(jnp.isfinite(ll)))
    print("KERNEL_OK")
</pallas_src>

<mosaic_0001>
module attributes {stable_mosaic.version = 11 : i64} {
  func.func @_step_loss_kernel(%arg0: i32, %arg1: memref<2x8xf32, #tpu.memory_space<smem>>, %arg2: memref<1x4x256xf32, #tpu.memory_space<vmem>>, %arg3: memref<1x4x256xf32, #tpu.memory_space<vmem>>, %arg4: memref<1x8x5xf32, #tpu.memory_space<vmem>>, %arg5: memref<1x1x1xf32, #tpu.memory_space<vmem>>) attributes {dimension_semantics = [#tpu.dimension_semantics<parallel>], iteration_bounds = array<i64: 2>, scalar_prefetch = 0 : i64, scratch_operands = 0 : i64, tpu.core_type = #tpu.core_type<tc>, window_params = [{transform_indices = @transform_0, window_bounds = array<i64: 2, 8>}, {transform_indices = @transform_1, window_bounds = array<i64: 1, 4, 256>}, {transform_indices = @transform_2, window_bounds = array<i64: 1, 4, 256>}, {transform_indices = @transform_3, window_bounds = array<i64: 1, 8, 5>}, {transform_indices = @transform_4, window_bounds = array<i64: 1, 1, 1>}]} {
    %0 = arith.index_cast %arg0 : i32 to index
    %c0 = arith.constant 0 : index
    %1 = memref.load %arg1[%0, %c0] : memref<2x8xf32, #tpu.memory_space<smem>>
    %2 = arith.index_cast %arg0 : i32 to index
    %c1 = arith.constant 1 : index
    %3 = memref.load %arg1[%2, %c1] : memref<2x8xf32, #tpu.memory_space<smem>>
    %4 = arith.index_cast %arg0 : i32 to index
    %c2 = arith.constant 2 : index
    %5 = memref.load %arg1[%4, %c2] : memref<2x8xf32, #tpu.memory_space<smem>>
    %6 = arith.index_cast %arg0 : i32 to index
    %c3 = arith.constant 3 : index
    %7 = memref.load %arg1[%6, %c3] : memref<2x8xf32, #tpu.memory_space<smem>>
    %8 = arith.index_cast %arg0 : i32 to index
    %c4 = arith.constant 4 : index
    %9 = memref.load %arg1[%8, %c4] : memref<2x8xf32, #tpu.memory_space<smem>>
    %10 = arith.index_cast %arg0 : i32 to index
    %c5 = arith.constant 5 : index
    %11 = memref.load %arg1[%10, %c5] : memref<2x8xf32, #tpu.memory_space<smem>>
    %12 = arith.index_cast %arg0 : i32 to index
    %c6 = arith.constant 6 : index
    %13 = memref.load %arg1[%12, %c6] : memref<2x8xf32, #tpu.memory_space<smem>>
    %c0_0 = arith.constant 0 : index
    %c0_1 = arith.constant 0 : index
    %c0_2 = arith.constant 0 : index
    %14 = vector.load %arg2[%c0_0, %c0_1, %c0_2] : memref<1x4x256xf32, #tpu.memory_space<vmem>>, vector<1x4x256xf32>
    %15 = vector.shape_cast %14 : vector<1x4x256xf32> to vector<4x256xf32>
    %c0_3 = arith.constant 0 : index
    %c0_4 = arith.constant 0 : index
    %c0_5 = arith.constant 0 : index
    %16 = vector.load %arg3[%c0_3, %c0_4, %c0_5] : memref<1x4x256xf32, #tpu.memory_space<vmem>>, vector<1x4x256xf32>
    %17 = vector.shape_cast %16 : vector<1x4x256xf32> to vector<4x256xf32>
    %18 = vector.broadcast %1 : f32 to vector<4x256xf32>
    %19 = arith.mulf %18, %15 : vector<4x256xf32>
    %20 = vector.broadcast %3 : f32 to vector<4x256xf32>
    %21 = arith.mulf %20, %17 : vector<4x256xf32>
    %22 = arith.addf %19, %21 : vector<4x256xf32>
    %c0_6 = arith.constant 0 : index
    %c0_7 = arith.constant 0 : index
    %c0_8 = arith.constant 0 : index
    %23 = vector.load %arg4[%c0_6, %c0_7, %c0_8] : memref<1x8x5xf32, #tpu.memory_space<vmem>>, vector<1x8x5xf32>
    %24 = vector.shape_cast %23 : vector<1x8x5xf32> to vector<8x5xf32>
    %25 = vector.extract_strided_slice %24 {offsets = [0, 0], sizes = [8, 4], strides = [1, 1]} : vector<8x5xf32> to vector<8x4xf32>
    %26 = vector.extract_strided_slice %24 {offsets = [0, 4], sizes = [8, 1], strides = [1, 1]} : vector<8x5xf32> to vector<8x1xf32>
    %cst = arith.constant dense<0.000000e+00> : vector<8x256xf32>
    %27 = tpu.matmul %25, %22, %cst {dimension_numbers = #tpu.dot_dimension_numbers<[1], [0], [0], [1], [0, 0, 1, 1], [], []>} : vector<8x4xf32>, vector<4x256xf32>, vector<8x256xf32> -> vector<8x256xf32>
    %28 = vector.broadcast %26 : vector<8x1xf32> to vector<8x256xf32>
    %29 = arith.addf %27, %28 : vector<8x256xf32>
    %30 = vector.extract_strided_slice %29 {offsets = [0, 0], sizes = [4, 256], strides = [1, 1]} : vector<8x256xf32> to vector<4x256xf32>
    %31 = vector.extract_strided_slice %29 {offsets = [4, 0], sizes = [4, 256], strides = [1, 1]} : vector<8x256xf32> to vector<4x256xf32>
    %cst_9 = arith.constant 5.000000e-01 : f32
    %32 = arith.cmpf ogt, %13, %cst_9 : f32
    %33 = arith.extui %32 : i1 to i32
    %c0_i32 = arith.constant 0 : i32
    %34 = arith.cmpi ne, %33, %c0_i32 : i32
    scf.if %34 {
      %cst_11 = arith.constant -5.000000e-01 : f32
      %38 = vector.broadcast %cst_11 : f32 to vector<4x256xf32>
      %39 = arith.mulf %38, %31 : vector<4x256xf32>
      %40 = math.exp %39 : vector<4x256xf32>
      %41 = arith.subf %15, %30 : vector<4x256xf32>
      %cst_12 = arith.constant 0.0322580636 : f32
      %42 = vector.broadcast %cst_12 : f32 to vector<4x256xf32>
      %43 = arith.addf %41, %42 : vector<4x256xf32>
      %44 = arith.mulf %40, %43 : vector<4x256xf32>
      %cst_13 = arith.constant 4.471500e-02 : f32
      %45 = vector.broadcast %cst_13 : f32 to vector<4x256xf32>
      %46 = arith.mulf %45, %44 : vector<4x256xf32>
      %47 = arith.mulf %46, %44 : vector<4x256xf32>
      %48 = arith.mulf %47, %44 : vector<4x256xf32>
      %49 = arith.addf %44, %48 : vector<4x256xf32>
      %cst_14 = arith.constant 0.797884583 : f32
      %50 = vector.broadcast %cst_14 : f32 to vector<4x256xf32>
      %51 = arith.mulf %50, %49 : vector<4x256xf32>
      %52 = math.tanh %51 : vector<4x256xf32>
      %cst_15 = arith.constant 1.000000e+00 : f32
      %53 = vector.broadcast %cst_15 : f32 to vector<4x256xf32>
      %54 = arith.addf %53, %52 : vector<4x256xf32>
      %cst_16 = arith.constant 5.000000e-01 : f32
      %55 = vector.broadcast %cst_16 : f32 to vector<4x256xf32>
      %56 = arith.mulf %55, %54 : vector<4x256xf32>
      %cst_17 = arith.constant 0.0322580636 : f32
      %57 = vector.broadcast %cst_17 : f32 to vector<4x256xf32>
      %58 = arith.subf %41, %57 : vector<4x256xf32>
      %59 = arith.mulf %40, %58 : vector<4x256xf32>
      %cst_18 = arith.constant 4.471500e-02 : f32
      %60 = vector.broadcast %cst_18 : f32 to vector<4x256xf32>
      %61 = arith.mulf %60, %59 : vector<4x256xf32>
      %62 = arith.mulf %61, %59 : vector<4x256xf32>
      %63 = arith.mulf %62, %59 : vector<4x256xf32>
      %64 = arith.addf %59, %63 : vector<4x256xf32>
      %cst_19 = arith.constant 0.797884583 : f32
      %65 = vector.broadcast %cst_19 : f32 to vector<4x256xf32>
      %66 = arith.mulf %65, %64 : vector<4x256xf32>
      %67 = math.tanh %66 : vector<4x256xf32>
      %cst_20 = arith.constant 1.000000e+00 : f32
      %68 = vector.broadcast %cst_20 : f32 to vector<4x256xf32>
      %69 = arith.addf %68, %67 : vector<4x256xf32>
      %cst_21 = arith.constant 5.000000e-01 : f32
      %70 = vector.broadcast %cst_21 : f32 to vector<4x256xf32>
      %71 = arith.mulf %70, %69 : vector<4x256xf32>
      %cst_22 = arith.constant 1.000000e-10 : f32
      %72 = vector.broadcast %cst_22 : f32 to vector<4x256xf32>
      %73 = arith.maximumf %56, %72 : vector<4x256xf32>
      %74 = math.log %73 : vector<4x256xf32>
      %cst_23 = arith.constant 1.000000e+00 : f32
      %75 = vector.broadcast %cst_23 : f32 to vector<4x256xf32>
      %76 = arith.subf %75, %71 : vector<4x256xf32>
      %cst_24 = arith.constant 1.000000e-10 : f32
      %77 = vector.broadcast %cst_24 : f32 to vector<4x256xf32>
      %78 = arith.maximumf %76, %77 : vector<4x256xf32>
      %79 = math.log %78 : vector<4x256xf32>
      %80 = arith.subf %56, %71 : vector<4x256xf32>
      %cst_25 = arith.constant 1.000000e-10 : f32
      %81 = vector.broadcast %cst_25 : f32 to vector<4x256xf32>
      %82 = arith.maximumf %80, %81 : vector<4x256xf32>
      %83 = math.log %82 : vector<4x256xf32>
      %cst_26 = arith.constant -0.967741906 : f32
      %84 = vector.broadcast %cst_26 : f32 to vector<4x256xf32>
      %85 = arith.cmpf ole, %15, %84 : vector<4x256xf32>
      %cst_27 = arith.constant 0.967741906 : f32
      %86 = vector.broadcast %cst_27 : f32 to vector<4x256xf32>
      %87 = arith.cmpf oge, %15, %86 : vector<4x256xf32>
      %88 = arith.select %87, %79, %83 : vector<4x256xi1>, vector<4x256xf32>
      %89 = arith.select %85, %74, %88 : vector<4x256xi1>, vector<4x256xf32>
      %90 = vector.shape_cast %89 : vector<4x256xf32> to vector<1x4x256xf32>
      %cst_28 = arith.constant dense<0.000000e+00> : vector<1xf32>
      %91 = vector.multi_reduction <add>, %90, %cst_28 [1, 2] : vector<1x4x256xf32> to vector<1xf32>
      %92 = vector.shape_cast %91 : vector<1xf32> to vector<1x1x1xf32>
      %93 = vector.extract %92[0, 0, 0] : f32 from vector<1x1x1xf32>
      %cst_29 = arith.constant 1.000000e+01 : f32
      %94 = arith.mulf %93, %cst_29 : f32
      %95 = vector.broadcast %94 : f32 to vector<1x1x1xf32>
      %c0_30 = arith.constant 0 : index
      %c0_31 = arith.constant 0 : index
      %c0_32 = arith.constant 0 : index
      %96 = vector.load %arg5[%c0_30, %c0_31, %c0_32] : memref<1x1x1xf32, #tpu.memory_space<vmem>>, vector<1x1x1xf32>
      tpu.vector_store %arg5[%c0_30, %c0_31, %c0_32], %95 {strides = array<i32>} : memref<1x1x1xf32, #tpu.memory_space<vmem>>, vector<1x1x1xf32>,
    } else {
    }
    %true = arith.constant true
    %35 = arith.xori %32, %true : i1
    %36 = arith.extui %35 : i1 to i32
    %c0_i32_10 = arith.constant 0 : i32
    %37 = arith.cmpi ne, %36, %c0_i32_10 : i32
    scf.if %37 {
      %38 = vector.broadcast %5 : f32 to vector<4x256xf32>
      %39 = arith.mulf %38, %15 : vector<4x256xf32>
      %40 = vector.broadcast %7 : f32 to vector<4x256xf32>
      %41 = arith.mulf %40, %22 : vector<4x256xf32>
      %42 = arith.addf %39, %41 : vector<4x256xf32>
      %43 = arith.subf %42, %30 : vector<4x256xf32>
      %44 = vector.broadcast %9 : f32 to vector<4x256xf32>
      %45 = arith.subf %31, %44 : vector<4x256xf32>
      %46 = arith.mulf %43, %43 : vector<4x256xf32>
      %47 = vector.broadcast %11 : f32 to vector<4x256xf32>
      %48 = arith.addf %47, %46 : vector<4x256xf32>
      %cst_11 = arith.constant 0.000000e+00 : f32
      %49 = vector.broadcast %cst_11 : f32 to vector<4x256xf32>
      %50 = arith.subf %49, %31 : vector<4x256xf32>
      %51 = math.exp %50 : vector<4x256xf32>
      %52 = arith.mulf %48, %51 : vector<4x256xf32>
      %53 = arith.addf %45, %52 : vector<4x256xf32>
      %cst_12 = arith.constant 1.000000e+00 : f32
      %54 = vector.broadcast %cst_12 : f32 to vector<4x256xf32>
      %55 = arith.subf %53, %54 : vector<4x256xf32>
      %cst_13 = arith.constant 5.000000e-01 : f32
      %56 = vector.broadcast %cst_13 : f32 to vector<4x256xf32>
      %57 = arith.mulf %56, %55 : vector<4x256xf32>
      %58 = vector.shape_cast %57 : vector<4x256xf32> to vector<1x4x256xf32>
      %cst_14 = arith.constant dense<0.000000e+00> : vector<1xf32>
      %59 = vector.multi_reduction <add>, %58, %cst_14 [1, 2] : vector<1x4x256xf32> to vector<1xf32>
      %60 = vector.shape_cast %59 : vector<1xf32> to vector<1x1x1xf32>
      %61 = vector.extract %60[0, 0, 0] : f32 from vector<1x1x1xf32>
      %cst_15 = arith.constant 0.000000e+00 : f32
      %62 = arith.subf %cst_15, %61 : f32
      %cst_16 = arith.constant 1.000000e+01 : f32
      %63 = arith.mulf %62, %cst_16 : f32
      %64 = vector.broadcast %63 : f32 to vector<1x1x1xf32>
      %c0_17 = arith.constant 0 : index
      %c0_18 = arith.constant 0 : index
      %c0_19 = arith.constant 0 : index
      %65 = vector.load %arg5[%c0_17, %c0_18, %c0_19] : memref<1x1x1xf32, #tpu.memory_space<vmem>>, vector<1x1x1xf32>
      tpu.vector_store %arg5[%c0_17, %c0_18, %c0_19], %64 {strides = array<i32>} : memref<1x1x1xf32, #tpu.memory_space<vmem>>, vector<1x1x1xf32>,
    } else {
    }
    return
  }
  func.func @transform_0(%arg0: i32) -> (i32, i32) {
    %c0_i32 = arith.constant 0 : i32
    %c0_i32_0 = arith.constant 0 : i32
    %c0_i32_1 = arith.constant 0 : i32
    return %c0_i32, %c0_i32_0 : i32, i32
  }
  func.func @transform_1(%arg0: i32) -> (i32, i32, i32) {
    %c0_i32 = arith.constant 0 : i32
    %c0_i32_0 = arith.constant 0 : i32
    %c0_i32_1 = arith.constant 0 : i32
    return %arg0, %c0_i32, %c0_i32_0 : i32, i32, i32
  }
  func.func @transform_2(%arg0: i32) -> (i32, i32, i32) {
    %c0_i32 = arith.constant 0 : i32
    %c0_i32_0 = arith.constant 0 : i32
    %c0_i32_1 = arith.constant 0 : i32
    return %arg0, %c0_i32, %c0_i32_0 : i32, i32, i32
  }
  func.func @transform_3(%arg0: i32) -> (i32, i32, i32) {
    %c0_i32 = arith.constant 0 : i32
    %c0_i32_0 = arith.constant 0 : i32
    %c0_i32_1 = arith.constant 0 : i32
    return %arg0, %c0_i32, %c0_i32_0 : i32, i32, i32
  }
  func.func @transform_4(%arg0: i32) -> (i32, i32, i32) {
    %c0_i32 = arith.constant 0 : i32
    %c0_i32_0 = arith.constant 0 : i32
    %c0_i32_1 = arith.constant 0 : i32
    return %arg0, %c0_i32, %c0_i32_0 : i32, i32, i32
  }
}

</mosaic_0001>

<llo_original>
// kernel: tpu_custom_call.1
$region0: #{tpu_custom_call.1}
  #allocation0 [shape = 'u32[]', space=smem, size = 0x4, offset = 0x4, fixed_abs, tag = 'smem constant byte address 0x4 - core index']
  #allocation1 [shape = 'u32[144,128]{1,0:T(1,128)}', space=vmem, size = 0x12000, scoped, tag = 'internal scratch']
  %s0 = inlined_call_operand.hbm [shape: f32[2,8], index: 0, kind: input, shape index: {}]
  %s1 = inlined_call_operand.vmem [shape: f32[2,4,256], index: 1, kind: input, shape index: {}]
  %s2 = inlined_call_operand.vmem [shape: f32[2,4,256], index: 2, kind: input, shape index: {}]
  %s3 = inlined_call_operand.vmem [shape: f32[2,8,5], index: 3, kind: input, shape index: {}]
  %s4 = inlined_call_operand.vmem [shape: f32[2,1,1], index: 4, kind: output, shape index: {}]
  %s5 = sld [smem:[#allocation0]]
  $region61: #{tpu_custom_call.1} parent=0
    _
  %s7 = ssub.s32 1, %s5
  %s8 = scalar_select 0, %s7, %s5
  $region1: #{tpu_custom_call.1} parent=0
    #allocation2 [shape = 'u8[1024]{0}', space=smem, size = 0x400, scoped, tag = 'input window, operand 0, single buffered']
    #allocation3 [shape = 's32[2]{0}', space=sflag, size = 0x8, scoped, tag = 'scoped memory for tpu_custom_call.1']
    %9 = vsyncpa [#allocation3], 0
    loop: start=0, step=1, limit=4
    $region2: #{tpu_custom_call.1} parent=1 // loop_pre_header
      _
    $region3: #{tpu_custom_call.1} parent=1 // loop_header
      %s11 = sphi 0, %s15
      %p12 = scmp.ge.s32.totalorder %s11, 4
      %s19 = sphi 0, %s19
      %s21 = sphi 0, %s19
      %s22 = sphi 0, %s21
      %s36 = sphi 0, %s22
      %s42 = sphi 0, %s44
      %s45 = sphi 0, %s42
      %s46 = sphi 0, %s45
      %s62 = sphi 0, %s46
      %s68 = sphi 0, %s70
      %s71 = sphi 0, %s68
      %s72 = sphi 0, %s71
      %s88 = sphi 0, %s72
      %s94 = sphi 0, %s96
      %s97 = sphi 0, %s94
      %s98 = sphi 0, %s97
      %s114 = sphi 0, %s98
      %s120 = sphi 0, %s122
      %s123 = sphi 0, %s120
      %s124 = sphi 0, %s123
      %s140 = sphi 0, %s124
    $region4: #{tpu_custom_call.1} parent=1 // loop_header_branch
      %14 = sbr.rel (%p12) target = $region8
    $region5: #{tpu_custom_call.1} parent=1 // loop_body
      %s16 = ssub.s32 %s11, 1
      %s17 = ssub.s32 %s11, 2
      %s18 = sadd.s32 %s11, 1
      %s20 = sadd.s32 %s19, 1
      %p23 = scmp.eq.s32.totalorder %s11, 1
      %p24 = scmp.ne.s32.totalorder %s19, %s21
      %p25 = scmp.eq.s32.totalorder %s11, 0
      %p26 = por %p24, %p25
      %p27 = scmp.ne.s32.totalorder %s19, %s21
      %p28 = scmp.eq.s32.totalorder %s16, 1
      %p29 = por %p27, %p28
      %p30 = scmp.ne.s32.totalorder %s21, %s22
      %p31 = scmp.eq.s32.totalorder %s16, 0
      %p32 = por %p30, %p31
      %p33 = scmp.ne.s32.totalorder %s21, %s22
      %p34 = scmp.eq.s32.totalorder %s17, 1
      %p35 = por %p33, %p34
      %p37 = scmp.ne.s32.totalorder %s22, %s36
      %p38 = scmp.eq.s32.totalorder %s17, 0
      %p39 = por %p37, %p38
      %s40 = ssub.s32 %s11, %s18
      %p41 = scmp.eq.s32.totalorder %s40, 0
      %s43 = sadd.s32 %s42, 1
      %s44 = scalar_select %p41, %s42, %s43
      %p47 = pneg %p41
      %p48 = scmp.eq.s32.totalorder %s11, 1
      %p49 = por %p47, %p48
      %p50 = scmp.ne.s32.totalorder %s42, %s45
      %p51 = scmp.eq.s32.totalorder %s11, 0
      %p52 = por %p50, %p51
      %p53 = scmp.ne.s32.totalorder %s42, %s45
      %p54 = scmp.eq.s32.totalorder %s16, 1
      %p55 = por %p53, %p54
      %p56 = scmp.ne.s32.totalorder %s45, %s46
      %p57 = scmp.eq.s32.totalorder %s16, 0
      %p58 = por %p56, %p57
      %p59 = scmp.ne.s32.totalorder %s45, %s46
      %p60 = scmp.eq.s32.totalorder %s17, 1
      %p61 = por %p59, %p60
      %p63 = scmp.ne.s32.totalorder %s46, %s62
      %p64 = scmp.eq.s32.totalorder %s17, 0
      %p65 = por %p63, %p64
      %s66 = ssub.s32 %s11, %s18
      %p67 = scmp.eq.s32.totalorder %s66, 0
      %s69 = sadd.s32 %s68, 1
      %s70 = scalar_select %p67, %s68, %s69
      %p73 = pneg %p67
      %p74 = scmp.eq.s32.totalorder %s11, 1
      %p75 = por %p73, %p74
      %p76 = scmp.ne.s32.totalorder %s68, %s71
      %p77 = scmp.eq.s32.totalorder %s11, 0
      %p78 = por %p76, %p77
      %p79 = scmp.ne.s32.totalorder %s68, %s71
      %p80 = scmp.eq.s32.totalorder %s16, 1
      %p81 = por %p79, %p80
      %p82 = scmp.ne.s32.totalorder %s71, %s72
      %p83 = scmp.eq.s32.totalorder %s16, 0
      %p84 = por %p82, %p83
      %p85 = scmp.ne.s32.totalorder %s71, %s72
      %p86 = scmp.eq.s32.totalorder %s17, 1
      %p87 = por %p85, %p86
      %p89 = scmp.ne.s32.totalorder %s72, %s88
      %p90 = scmp.eq.s32.totalorder %s17, 0
      %p91 = por %p89, %p90
      %s92 = ssub.s32 %s11, %s18
      %p93 = scmp.eq.s32.totalorder %s92, 0
      %s95 = sadd.s32 %s94, 1
      %s96 = scalar_select %p93, %s94, %s95
      %p99 = pneg %p93
      %p100 = scmp.eq.s32.totalorder %s11, 1
      %p101 = por %p99, %p100
      %p102 = scmp.ne.s32.totalorder %s94, %s97
      %p103 = scmp.eq.s32.totalorder %s11, 0
      %p104 = por %p102, %p103
      %p105 = scmp.ne.s32.totalorder %s94, %s97
      %p106 = scmp.eq.s32.totalorder %s16, 1
      %p107 = por %p105, %p106
      %p108 = scmp.ne.s32.totalorder %s97, %s98
      %p109 = scmp.eq.s32.totalorder %s16, 0
      %p110 = por %p108, %p109
      %p111 = scmp.ne.s32.totalorder %s97, %s98
      %p112 = scmp.eq.s32.totalorder %s17, 1
      %p113 = por %p111, %p112
      %p115 = scmp.ne.s32.totalorder %s98, %s114
      %p116 = scmp.eq.s32.totalorder %s17, 0
      %p117 = por %p115, %p116
      %s118 = ssub.s32 %s11, %s18
      %p119 = scmp.eq.s32.totalorder %s118, 0
      %s121 = sadd.s32 %s120, 1
      %s122 = scalar_select %p119, %s120, %s121
      %p125 = pneg %p119
      %p126 = scmp.eq.s32.totalorder %s11, 1
      %p127 = por %p125, %p126
      %p128 = scmp.ne.s32.totalorder %s120, %s123
      %p129 = scmp.eq.s32.totalorder %s11, 0
      %p130 = por %p128, %p129
      %p131 = scmp.ne.s32.totalorder %s120, %s123
      %p132 = scmp.eq.s32.totalorder %s16, 1
      %p133 = por %p131, %p132
      %p134 = scmp.ne.s32.totalorder %s123, %s124
      %p135 = scmp.eq.s32.totalorder %s16, 0
      %p136 = por %p134, %p135
      %p137 = scmp.ne.s32.totalorder %s123, %s124
      %p138 = scmp.eq.s32.totalorder %s17, 1
      %p139 = por %p137, %p138
      %p141 = scmp.ne.s32.totalorder %s124, %s140
      %p142 = scmp.eq.s32.totalorder %s17, 0
      %p143 = por %p141, %p142
      %p144 = scmp.le.s32.totalorder 1, %s11
      %p145 = scmp.lt.s32.totalorder %s11, 3
      %p146 = pnand %p144, %p145
      %p147 = pneg %p146
      // Predicated region
      $region9: #{tpu_custom_call.1} parent=5 // pred_check
        _
      $region10: #{tpu_custom_call.1} parent=5 // pred_check_branch
        %149 = sbr.rel (%p146) target = $region12
      $region11: #{tpu_custom_call.1} parent=5 // pred_region
        %s150 = ssub.s32 %s11, 1
        // Predicated region
        $region13: #{tpu_custom_call.1} parent=11 // pred_check
          %p151 = pneg %p32
        $region14: #{tpu_custom_call.1} parent=11 // pred_check_branch
          %153 = sbr.rel (%p151) target = $region16
        $region15: #{tpu_custom_call.1} parent=11 // pred_region
          %s155 = ssub.s32 32, 32
          %156 = vsyncadd [#allocation3], %s155
          %159 = dma.hbm_to_smem %s0, 32, [#allocation2], [#allocation3]
        $region16: #{tpu_custom_call.1} parent=11 // pred_fallthru
          _
      $region12: #{tpu_custom_call.1} parent=5 // pred_fallthru
        _
      %p160 = scmp.lt.s32.totalorder %s11, 2
      // Predicated region
      $region17: #{tpu_custom_call.1} parent=5 // pred_check
        %p161 = pneg %p160
      $region18: #{tpu_custom_call.1} parent=5 // pred_check_branch
        %163 = sbr.rel (%p161) target = $region20
      $region19: #{tpu_custom_call.1} parent=5 // pred_region
        // Predicated region
        $region21: #{tpu_custom_call.1} parent=19 // pred_check
          %p164 = pneg %p52
        $region22: #{tpu_custom_call.1} parent=19 // pred_check_branch
          %166 = sbr.rel (%p164) target = $region24
        $region23: #{tpu_custom_call.1} parent=19 // pred_region
          %p167 = scmp.lt.s32.totalorder %s11, 1
          %s168 = scalar_select %p167, %s11, 1
          %s169 = smul.addr %s168, 2
          %s170 = smul.addr %s169, 4
          %s171 = scalar_lea.vmem %s1, %s170
        $region24: #{tpu_custom_call.1} parent=19 // pred_fallthru
          _
        // Predicated region
        $region25: #{tpu_custom_call.1} parent=19 // pred_check
          %p172 = pneg %p78
        $region26: #{tpu_custom_call.1} parent=19 // pred_check_branch
          %174 = sbr.rel (%p172) target = $region28
        $region27: #{tpu_custom_call.1} parent=19 // pred_region
          %p175 = scmp.lt.s32.totalorder %s11, 1
          %s176 = scalar_select %p175, %s11, 1
          %s177 = smul.addr %s176, 2
          %s178 = smul.addr %s177, 4
          %s179 = scalar_lea.vmem %s2, %s178
        $region28: #{tpu_custom_call.1} parent=19 // pred_fallthru
          _
        // Predicated region
        $region29: #{tpu_custom_call.1} parent=19 // pred_check
          %p180 = pneg %p104
        $region30: #{tpu_custom_call.1} parent=19 // pred_check_branch
          %182 = sbr.rel (%p180) target = $region32
        $region31: #{tpu_custom_call.1} parent=19 // pred_region
          %p183 = scmp.lt.s32.totalorder %s11, 1
          %s184 = scalar_select %p183, %s11, 1
          %s185 = smul.addr %s184, 8
          %s186 = scalar_lea.vmem %s3, %s185
        $region32: #{tpu_custom_call.1} parent=19 // pred_fallthru
          _
      $region20: #{tpu_custom_call.1} parent=5 // pred_fallthru
        _
      %p187 = scmp.le.s32.totalorder 1, %s11
      %p188 = scmp.lt.s32.totalorder %s11, 3
      %p189 = pnand %p187, %p188
      %p190 = pneg %p189
      // Predicated region
      $region33: #{tpu_custom_call.1} parent=5 // pred_check
        _
      $region34: #{tpu_custom_call.1} parent=5 // pred_check_branch
        %192 = sbr.rel (%p189) target = $region36
      $region35: #{tpu_custom_call.1} parent=5 // pred_region
        %s193 = ssub.s32 %s11, 1
        // Predicated region
        $region37: #{tpu_custom_call.1} parent=35 // pred_check
          %p194 = pneg %p32
        $region38: #{tpu_custom_call.1} parent=35 // pred_check_branch
          %196 = sbr.rel (%p194) target = $region40
        $region39: #{tpu_custom_call.1} parent=35 // pred_region
          %197 = dma.done [#allocation3], 32
        $region40: #{tpu_custom_call.1} parent=35 // pred_fallthru
          _
        %198 = sfence
        %p199 = pneg %p32
        %p200 = pneg %p29
        %p201 = scmp.lt.s32.totalorder %s16, 1
        %s202 = scalar_select %p201, %s16, 1
        %s203 = smul.addr %s202, 2
        %s204 = smul.addr %s203, 4
        %s205 = scalar_lea.vmem %s1, %s204
        %p206 = pneg %p58
        %p207 = pneg %p55
        %p208 = scmp.lt.s32.totalorder %s16, 1
        %s209 = scalar_select %p208, %s16, 1
        %s210 = smul.addr %s209, 2
        %s211 = smul.addr %s210, 4
        %s212 = scalar_lea.vmem %s2, %s211
        %p213 = pneg %p84
        %p214 = pneg %p81
        %p215 = scmp.lt.s32.totalorder %s16, 1
        %s216 = scalar_select %p215, %s16, 1
        %s217 = smul.addr %s216, 8
        %s218 = scalar_lea.vmem %s3, %s217
        %p219 = pneg %p110
        %p220 = pneg %p107
        %p221 = pneg %p136
        %p222 = pneg %p133
        %p223 = scmp.lt.s32.totalorder %s16, 1
        %s224 = scalar_select %p223, %s16, 1
        %s225 = scalar_lea.vmem %s4, %s224
        %p226 = scmp.lt.s32.totalorder %s16, 1
        %s227 = scalar_select %p226, %s16, 1
        %s228 = smul.addr %s227, 2
        %s229 = smul.addr %s228, 4
        %s230 = scalar_lea.vmem %s1, %s229
        %p231 = scmp.lt.s32.totalorder %s16, 1
        %s232 = scalar_select %p231, %s16, 1
        %s233 = smul.addr %s232, 2
        %s234 = smul.addr %s233, 4
        %s235 = scalar_lea.vmem %s2, %s234
        %p236 = scmp.lt.s32.totalorder %s16, 1
        %s237 = scalar_select %p236, %s16, 1
        %s238 = smul.addr %s237, 8
        %s239 = scalar_lea.vmem %s3, %s238
        %p240 = scmp.lt.s32.totalorder %s16, 1
        %s241 = scalar_select %p240, %s16, 1
        %s242 = scalar_lea.vmem %s4, %s241
        %s243 = smul.u32 %s16, 128
        %s244 = sld [smem:[#allocation2 + %s243]]
        %s245 = sadd.s32 %s243, 1
        %s246 = sld [smem:[#allocation2 + %s245]]
        %s247 = sadd.s32 %s243, 2
        %s248 = sld [smem:[#allocation2 + %s247]]
        %s249 = sadd.s32 %s243, 3
        %s250 = sld [smem:[#allocation2 + %s249]]
        %s251 = sadd.s32 %s243, 4
        %s252 = sld [smem:[#allocation2 + %s251]]
        %s253 = sadd.s32 %s243, 5
        %s254 = sld [smem:[#allocation2 + %s253]]
        %s255 = sadd.s32 %s243, 6
        %s256 = sld [smem:[#allocation2 + %s255]]
        %v257 = vld [vmem:[%s230] sm:$0xff]
        %v258 = vld [vmem:[%s235] sm:$0xff]
        %v259 = vstv %s244
        %v260 = vmul.f32 %v259, %v257
        %v261 = vstv %s246
        %v262 = vmul.f32 %v261, %v258
        %v263 = vadd.f32 %v260, %v262
        %v264 = vld [vmem:[%s239] sm:$0xff]
        %266 = vset.pattern.permute.xlu0 4
        %267 = vperm.xlu0 %266, %v264
        %v268 = vpop.permute.xlu0 %267
        %v271 = vcombine.high %v263, %v263
        %vm272 = vcmask 31744
        %v273 = vsel %vm272, %v264, 0
        %vm275 = vcmask 1043456
        %v276 = vsel %vm275, %v263, 0
        %v278 = vsel %vm275, %v271, 0
        %280 = vmatprep.subr.mxu0 %v278
        %281 = vmatpush1.msra.mxu0 %v276
        %282 = vmatprep.subr.mxu0 0.0
        %283 = vmatpush1.msra.mxu0 0.0
        %284 = vmatprep.subr.mxu0 0.0
        %285 = vmatpush1.msra.mxu0 0.0
        %286 = vmatprep.subr.mxu0 0.0
        %287 = vmatpush1.msra.mxu0 0.0
        %288 = vmatprep.subr.mxu0 0.0
        %289 = vmatpush1.msra.mxu0 0.0
        %290 = vmatprep.subr.mxu0 0.0
        %291 = vmatpush1.msra.mxu0 0.0
        %292 = vmatprep.subr.mxu0 0.0
        %293 = vmatpush1.msra.mxu0 0.0
        %294 = vmatprep.subr.mxu0 0.0
        %295 = vmatpush1.msra.mxu0 0.0
        %296 = vmatprep.subr.mxu0 0.0
        %297 = vmatpush1.msra.mxu0 0.0
        %298 = vmatprep.subr.mxu0 0.0
        %299 = vmatpush1.msra.mxu0 0.0
        %300 = vmatprep.subr.mxu0 0.0
        %301 = vmatpush1.msra.mxu0 0.0
        %302 = vmatprep.subr.mxu0 0.0
        %303 = vmatpush1.msra.mxu0 0.0
        %304 = vmatprep.subr.mxu0 0.0
        %305 = vmatpush1.msra.mxu0 0.0
        %306 = vmatprep.subr.mxu0 0.0
        %307 = vmatpush1.msra.mxu0 0.0
        %308 = vmatprep.subr.mxu0 0.0
        %309 = vmatpush1.msra.mxu0 0.0
        %310 = vmatprep.subr.mxu0 0.0
        %311 = vmatpush1.msra.mxu0 0.0
        %312 = vmatprep.subr.mxu0 0.0
        %313 = vmatpush1.msra.mxu0 0.0
        %314 = vmatprep.subr.mxu0 0.0
        %315 = vmatpush1.msra.mxu0 0.0
        %316 = vmatprep.subr.mxu0 0.0
        %317 = vmatpush1.msra.mxu0 0.0
        %318 = vmatprep.subr.mxu0 0.0
        %319 = vmatpush1.msra.mxu0 0.0
        %320 = vmatprep.subr.mxu0 0.0
        %321 = vmatpush1.msra.mxu0 0.0
        %322 = vmatprep.subr.mxu0 0.0
        %323 = vmatpush1.msra.mxu0 0.0
        %324 = vmatprep.subr.mxu0 0.0
        %325 = vmatpush1.msra.mxu0 0.0
        %326 = vmatprep.subr.mxu0 0.0
        %327 = vmatpush1.msra.mxu0 0.0
        %328 = vmatprep.subr.mxu0 0.0
        %329 = vmatpush1.msra.mxu0 0.0
        %330 = vmatprep.subr.mxu0 0.0
        %331 = vmatpush1.msra.mxu0 0.0
        %332 = vmatprep.subr.mxu0 0.0
        %333 = vmatpush1.msra.mxu0 0.0
        %334 = vmatprep.subr.mxu0 0.0
        %335 = vmatpush1.msra.mxu0 0.0
        %336 = vmatprep.subr.mxu0 0.0
        %337 = vmatpush1.msra.mxu0 0.0
        %338 = vmatprep.subr.mxu0 0.0
        %339 = vmatpush1.msra.mxu0 0.0
        %340 = vmatprep.subr.mxu0 0.0
        %341 = vmatpush1.msra.mxu0 0.0
        %342 = vmatprep.subr.mxu0 0.0
        %343 = vmatpush1.msra.mxu0 0.0
        %344 = vmatprep.mubr.f32.mxu0 0.0
        %345 = vmatmul.mubr.f32.gmra.mrb[0].mxu0 %v273
        %v346 = vpop.f32.mrb[0].mxu0
        %v347 = vadd.f32 %v268, %v346
        %v348 = vpop.f32.mrb[0].mxu0
        %v349 = vadd.f32 %v268, %v348
        %350 = vdwg.mxu0
        %p351 = scmp.gt.f32.partialorder %s256, 0.5
        // Predicated region
        $region41: #{tpu_custom_call.1} parent=35 // pred_check
          %p352 = pneg %p351
        $region42: #{tpu_custom_call.1} parent=35 // pred_check_branch
          %354 = sbr.rel (%p352) target = $region44
        $region43: #{tpu_custom_call.1} parent=35 // pred_region
          %v355 = vmul.f32 %v347, -0.5
          %v356 = vmul.f32 %v349, -0.5
          %v357 = vmul.f32 %v355, 1.442695
          %v358 = vpow.pop %v357
          %v359 = vmul.f32 %v356, 1.442695
          %v360 = vpow.pop %v359
          %v363 = vcombine.low %v347, %v349
          %v365 = vsub.f32 %v257, %v363
          %v366 = vadd.f32 %v365, 0.032258064
          %v368 = vcombine.low %v366, %v366
          %v370 = vmul.f32 %v358, %v368
          %v371 = vmul.f32 %v360, %v366
          %v372 = vmul.f32 %v370, 0.044715
          %v373 = vmul.f32 %v371, 0.044715
          %v374 = vmul.f32 %v372, %v370
          %v375 = vmul.f32 %v373, %v371
          %v376 = vmul.f32 %v374, %v370
          %v377 = vmul.f32 %v375, %v371
          %v378 = vadd.f32 %v370, %v376
          %v379 = vadd.f32 %v371, %v377
          %v380 = vmul.f32 %v378, 0.7978846
          %v381 = vmul.f32 %v379, 0.7978846
          %v382 = vtanh.pop %v380
          %v383 = vtanh.pop %v381
          %v384 = vadd.f32 %v382, 1.0
          %v385 = vadd.f32 %v383, 1.0
          %v386 = vmul.f32 %v384, 0.5
          %v387 = vmul.f32 %v385, 0.5
          %v388 = vsub.f32 %v365, 0.032258064
          %v390 = vcombine.low %v388, %v388
          %v392 = vmul.f32 %v358, %v390
          %v393 = vmul.f32 %v360, %v388
          %v394 = vmul.f32 %v392, 0.044715
          %v395 = vmul.f32 %v393, 0.044715
          %v396 = vmul.f32 %v394, %v392
          %v397 = vmul.f32 %v395, %v393
          %v398 = vmul.f32 %v396, %v392
          %v399 = vmul.f32 %v397, %v393
          %v400 = vadd.f32 %v392, %v398
          %v401 = vadd.f32 %v393, %v399
          %v402 = vmul.f32 %v400, 0.7978846
          %v403 = vmul.f32 %v401, 0.7978846
          %v404 = vtanh.pop %v402
          %v405 = vtanh.pop %v403
          %v406 = vadd.f32 %v404, 1.0
          %v407 = vadd.f32 %v405, 1.0
          %v408 = vmul.f32 %v406, 0.5
          %v409 = vmul.f32 %v407, 0.5
          %v410 = vmax.f32 %v386, 1e-10
          %v411 = vmax.f32 %v387, 1e-10
          %v412 = vlog2.pop %v410
          %v413 = vmul.f32 %v412, 0.6931472
          %v414 = vlog2.pop %v411
          %v415 = vmul.f32 %v414, 0.6931472
          %v416 = vsub.f32 1.0, %v408
          %v417 = vsub.f32 1.0, %v409
          %v418 = vmax.f32 %v416, 1e-10
          %v419 = vmax.f32 %v417, 1e-10
          %v420 = vlog2.pop %v418
          %v421 = vmul.f32 %v420, 0.6931472
          %v422 = vlog2.pop %v419
          %v423 = vmul.f32 %v422, 0.6931472
          %v424 = vsub.f32 %v386, %v408
          %v425 = vsub.f32 %v387, %v409
          %v426 = vmax.f32 %v424, 1e-10
          %v427 = vmax.f32 %v425, 1e-10
          %v428 = vlog2.pop %v426
          %v429 = vmul.f32 %v428, 0.6931472
          %v430 = vlog2.pop %v427
          %v431 = vmul.f32 %v430, 0.6931472
          %vm432 = vcmp.le.f32.partialorder %v257, -0.9677419
          %vm433 = vcmp.ge.f32.partialorder %v257, 0.9677419
          %v436 = vcombine.high %v421, %v423
          %v440 = vcombine.high %v429, %v431
          %v442 = vsel %vm433, %v436, %v440
          %v445 = vcombine.high %v413, %v415
          %v447 = vsel %vm432, %v445, %v442
          %v449 = vcombine.high %v447, %v447
          %v451 = vsel %vm275, %v447, 0.0
          %v452 = vsel %vm275, %v449, 0.0
          %v453 = vadd.f32 %v451, %v452
          %454 = vadd.xlane.f32.xlu0 %v453
          %v455 = vpop.xlane.xlu0 %454
          %v456 = vrot.slane %v455, 4
          %v457 = vadd.f32 %v455, %v456
          %v458 = vrot.slane %v457, 2
          %v459 = vadd.f32 %v457, %v458
          %v460 = vrot.slane %v459, 1
          %v461 = vadd.f32 %v459, %v460
          %s462 = vtos %v461
          %s463 = smul.f32 %s462, 10.0
          %v464 = vstv %s463
          %vm465 = vcmask 0
          %466 = vst.msk [vmem:[%s242] sm:$0x1] %vm465, %v464
        $region44: #{tpu_custom_call.1} parent=35 // pred_fallthru
          _
        %p467 = pneg %p351
        // Predicated region
        $region45: #{tpu_custom_call.1} parent=35 // pred_check
          _
        $region46: #{tpu_custom_call.1} parent=35 // pred_check_branch
          %469 = sbr.rel (%p351) target = $region48
        $region47: #{tpu_custom_call.1} parent=35 // pred_region
          %v470 = vstv %s248
          %v471 = vmul.f32 %v470, %v257
          %v472 = vstv %s250
          %v473 = vmul.f32 %v472, %v263
          %v474 = vadd.f32 %v471, %v473
          %v477 = vcombine.low %v347, %v349
          %v479 = vsub.f32 %v474, %v477
          %v480 = vstv %s252
          %v481 = vsub.f32 %v347, %v480
          %v482 = vsub.f32 %v349, %v480
          %v483 = vmul.f32 %v479, %v479
          %v484 = vstv %s254
          %v485 = vadd.f32 %v484, %v483
          %v486 = vsub.f32 0.0, %v347
          %v487 = vsub.f32 0.0, %v349
          %v488 = vmul.f32 %v486, 1.442695
          %v489 = vpow.pop %v488
          %v490 = vmul.f32 %v487, 1.442695
          %v491 = vpow.pop %v490
          %v494 = vcombine.high %v489, %v491
          %v496 = vmul.f32 %v485, %v494
          %v498 = vcombine.low %v496, %v496
          %v500 = vadd.f32 %v481, %v498
          %v501 = vadd.f32 %v482, %v496
          %v502 = vsub.f32 %v500, 1.0
          %v503 = vsub.f32 %v501, 1.0
          %v504 = vmul.f32 %v502, 0.5
          %v505 = vmul.f32 %v503, 0.5
          %v508 = vrot.slane %v504, 4
          %v509 = vrot.slane %v505, 4
          %v512 = vsel %vm275, %v508, 0.0
          %v513 = vsel %vm275, %v509, 0.0
          %v514 = vadd.f32 %v512, %v513
          %515 = vadd.xlane.f32.xlu0 %v514
          %v516 = vpop.xlane.xlu0 %515
          %v517 = vrot.slane %v516, 4
          %v518 = vadd.f32 %v516, %v517
          %v519 = vrot.slane %v518, 2
          %v520 = vadd.f32 %v518, %v519
          %v521 = vrot.slane %v520, 1
          %v522 = vadd.f32 %v520, %v521
          %s523 = vtos %v522
          %s524 = ssub.f32 0.0, %s523
          %s525 = smul.f32 %s524, 10.0
          %v526 = vstv %s525
          %vm527 = vcmask 0
          %528 = vst.msk [vmem:[%s242] sm:$0x1] %vm527, %v526
        $region48: #{tpu_custom_call.1} parent=35 // pred_fallthru
          _
        %p529 = scmp.lt.s32.totalorder %s16, 1
        %s530 = scalar_select %p529, %s16, 1
        %s531 = scalar_lea.vmem %s4, %s530
        // Predicated region
        $region49: #{tpu_custom_call.1} parent=35 // pred_check
          %p532 = pneg %p133
        $region50: #{tpu_custom_call.1} parent=35 // pred_check_branch
          %534 = sbr.rel (%p532) target = $region52
        $region51: #{tpu_custom_call.1} parent=35 // pred_region
          _
        $region52: #{tpu_custom_call.1} parent=35 // pred_fallthru
          _
      $region36: #{tpu_custom_call.1} parent=5 // pred_fallthru
        _
      %p535 = scmp.le.s32.totalorder 2, %s11
      // Predicated region
      $region53: #{tpu_custom_call.1} parent=5 // pred_check
        %p536 = pneg %p535
      $region54: #{tpu_custom_call.1} parent=5 // pred_check_branch
        %538 = sbr.rel (%p536) target = $region56
      $region55: #{tpu_custom_call.1} parent=5 // pred_region
        %s539 = ssub.s32 %s11, 2
        // Predicated region
        $region57: #{tpu_custom_call.1} parent=55 // pred_check
          %p540 = pneg %p139
        $region58: #{tpu_custom_call.1} parent=55 // pred_check_branch
          %542 = sbr.rel (%p540) target = $region60
        $region59: #{tpu_custom_call.1} parent=55 // pred_region
          %p543 = scmp.lt.s32.totalorder %s17, 1
          %s544 = scalar_select %p543, %s17, 1
          %s545 = scalar_lea.vmem %s4, %s544
        $region60: #{tpu_custom_call.1} parent=55 // pred_fallthru
          _
      $region56: #{tpu_custom_call.1} parent=5 // pred_fallthru
        _
    $region6: #{tpu_custom_call.1} parent=1 // loop_footer
      %s15 = sadd.s32 1, %s11
    $region7: #{tpu_custom_call.1} parent=1 // loop_footer_branch
      %10 = sbr.rel target = $region3
    $region8: #{tpu_custom_call.1} parent=1 // loop_exit
      _
    %546 = vsyncpa [#allocation3], 1
    %s547 = scalar_lea.sflag [#allocation3], 1
    %548 = vsyncpa %s547, 1

</llo_original>
